<compile_context>
chip_gen: v7x
topology: tpu7x:2x2x1
jax: 0.10.0
libtpu: 0.0.40
codegen_flags: <defaults>
</compile_context>

<pallas_src>
import functools
import math

import jax
import jax.numpy as jnp
from jax.experimental import pallas as pl
from jax.experimental.pallas import tpu as pltpu

EPS = 1e-12  # F.normalize default eps


def _round_up(x, m):
    return ((x + m - 1) // m) * m


def _vmem_budget_and_limit():
    """Generation-gated VMEM budget (bytes for data tiles) and scoped limit."""
    cap = 64 * 1024 * 1024  # conservative fallback: v7x per-TensorCore VMEM
    try:
        cap = int(pltpu.get_tpu_info().vmem_capacity_bytes)
    except Exception:
        pass
    # Leave headroom for compiler-internal scratch / semaphores.
    limit = min(int(cap * 0.75), 96 * 1024 * 1024)   # 96 MiB on v5e/v6e, 48 MiB on v7x
    budget = int(limit * 0.85)
    return budget, limit


def _arc_subcenter_kernel(x_ref, w_ref, o_ref, *, num_sub):
    """One (class-tile, batch-tile) grid step.

    x_ref : (TB, D_pad)        pre-normalized features tile (compute dtype)
    w_ref : (D_pad, k * TC)    pre-normalized, packed weight tile (compute dtype)
    o_ref : (TB, TC)           max-over-sub-centers cosine output tile
    """
    # Single fused MXU matmul over all k sub-centers, f32 accumulation.
    cos_all = jnp.dot(x_ref[...], w_ref[...], preferred_element_type=jnp.float32)

    tc = o_ref.shape[-1]
    # Max over the k lane-aligned (TB, TC) slices -> pure VPU work.
    res = cos_all[:, 0:tc]
    for r in range(1, num_sub):
        res = jnp.maximum(res, cos_all[:, r * tc:(r + 1) * tc])

    o_ref[...] = res.astype(o_ref.dtype)


def _pack_weight(weight, *, out_features, k, tc, c_pad, d_pad, compute_dtype):
    """Normalize rows and pack to (D_pad, n_ctiles * k * tc), lane-dense.

    NOTE: for inference with a static weight, call this once and cache the
    result; it is the only per-call full pass over the weight besides the
    kernel's own single streamed read.
    """
    C, D = out_features, weight.shape[1]
    w32 = weight.astype(jnp.float32)
    norm = jnp.sqrt(jnp.sum(w32 * w32, axis=-1, keepdims=True))
    wn = w32 / jnp.maximum(norm, EPS)                              # (C*k, D)

    w3 = wn.reshape(C, k, D)                                       # (C, k, D)
    w3 = jnp.pad(w3, ((0, c_pad - C), (0, 0), (0, d_pad - D)))     # (c_pad, k, D_pad)
    n_ctiles = c_pad // tc
    w4 = w3.reshape(n_ctiles, tc, k, d_pad)
    w4 = jnp.transpose(w4, (3, 0, 2, 1))                           # (D_pad, n_ct, k, tc)
    return w4.reshape(d_pad, n_ctiles * k * tc).astype(compute_dtype)


def arc_margin_subcenter(features, weight, *, out_features, k, use_bf16=True):
    """features: [B, in_features], weight: [out_features*k, in_features]."""
    B, D = features.shape
    assert weight.shape == (out_features * k, D)

    compute_dtype = jnp.bfloat16 if use_bf16 else jnp.float32
    itemsize = jnp.dtype(compute_dtype).itemsize
    out_dtype = features.dtype
    out_itemsize = jnp.dtype(out_dtype).itemsize

    budget, vmem_limit = _vmem_budget_and_limit()

    # ---- tile sizes --------------------------------------------------------
    d_pad = _round_up(D, 128)                 # lane-aligned contraction dim
    tb_align = 16 if use_bf16 else 8          # sublane packing of compute dtype
    tb_cap = 512                              # (v5e: ~256 is already compute-bound)
    tb = min(tb_cap, _round_up(B, tb_align))

    # Joint (tb, tc) selection under the double-buffered VMEM budget:
    #   2 x weight tile (D_pad, k*tc) + 2 x x tile (tb, D_pad) + 2 x out tile (tb, tc)
    tc = None
    while True:
        x_bytes = 2 * tb * d_pad * itemsize
        for cand in (2048, 1024, 512, 256, 128):
            w_bytes = 2 * d_pad * k * cand * itemsize
            o_bytes = 2 * tb * cand * out_itemsize
            if w_bytes + x_bytes + o_bytes <= budget:
                tc = cand
                break
        if tc is not None or tb <= tb_align:
            break
        tb = max(tb_align, _round_up(tb // 2, tb_align))
    if tc is None:
        tc = 128  # fallback for extreme D; vmem_limit still has headroom
    tc = min(tc, _round_up(out_features, 128))

    b_pad = _round_up(B, tb)
    c_pad = _round_up(out_features, tc)
    n_btiles = b_pad // tb
    n_ctiles = c_pad // tc

    # ---- wrapper-side prep (one-time XLA work; cache w_packed if static) ----
    w_packed = _pack_weight(weight, out_features=out_features, k=k, tc=tc,
                            c_pad=c_pad, d_pad=d_pad, compute_dtype=compute_dtype)

    x32 = features.astype(jnp.float32)
    xnorm = jnp.sqrt(jnp.sum(x32 * x32, axis=-1, keepdims=True))
    xn = x32 / jnp.maximum(xnorm, EPS)
    xn = jnp.pad(xn, ((0, b_pad - B), (0, d_pad - D))).astype(compute_dtype)

    # ---- pallas_call ---------------------------------------------------------
    # Grid: class tiles OUTER, batch tiles INNER -> weight tile DMA'd once per
    # class tile and reused across all batch tiles.
    grid = (n_ctiles, n_btiles)

    cost = pl.CostEstimate(
        flops=2 * b_pad * c_pad * k * d_pad,
        transcendentals=0,
        bytes_accessed=(int(w_packed.size) * itemsize          # weight streamed once
                        + n_ctiles * int(xn.size) * itemsize   # x re-streamed per class tile
                        + b_pad * c_pad * out_itemsize),
    )

    out = pl.pallas_call(
        functools.partial(_arc_subcenter_kernel, num_sub=k),
        out_shape=jax.ShapeDtypeStruct((b_pad, c_pad), out_dtype),
        grid_spec=pltpu.PrefetchScalarGridSpec(
            num_scalar_prefetch=0,
            grid=grid,
            in_specs=[
                pl.BlockSpec((tb, d_pad), lambda j, i: (i, 0)),
                pl.BlockSpec((d_pad, k * tc), lambda j, i: (0, j)),
            ],
            out_specs=pl.BlockSpec((tb, tc), lambda j, i: (i, j)),
        ),
        compiler_params=pltpu.CompilerParams(
            # No cross-tile state left in the kernel -> both axes independent;
            # v7x megacore can shard whichever axis has >= 2 tiles.
            dimension_semantics=("parallel", "parallel"),
            vmem_limit_bytes=vmem_limit,
        ),
        cost_estimate=cost,
    )(xn, w_packed)

    return out[:B, :out_features]


def _reference(features, weight, out_features, k):
    xn = features / jnp.maximum(
        jnp.linalg.norm(features, axis=-1, keepdims=True), EPS)
    wn = weight / jnp.maximum(
        jnp.linalg.norm(weight, axis=-1, keepdims=True), EPS)
    cos_all = (xn @ wn.T).reshape(-1, out_features, k)
    return jnp.max(cos_all, axis=2)


if __name__ == "__main__":
    def run_case(batch, in_features, out_features, k, use_bf16, atol, key):
        kx, kw = jax.random.split(key)
        features = jax.random.normal(kx, (batch, in_features), dtype=jnp.float32)
        # Deterministic init matching reset_parameters(): uniform(-stdv, stdv)
        stdv = 1.0 / math.sqrt(in_features)
        weight = jax.random.uniform(
            kw, (out_features * k, in_features),
            minval=-stdv, maxval=stdv, dtype=jnp.float32)

        out = arc_margin_subcenter(features, weight,
                                   out_features=out_features, k=k,
                                   use_bf16=use_bf16)
        out = jax.block_until_ready(out)
        ref = _reference(features, weight, out_features, k)
        assert out.shape == (batch, out_features)
        err = float(jnp.max(jnp.abs(out - ref)))
        assert err < atol, f"max abs err {err} >= {atol}"

    key = jax.random.PRNGKey(0)
    k1, k2, k3 = jax.random.split(key, 3)

    # Small shapes matching the module defaults; f32 MXU path, tight tolerance.
    run_case(batch=2, in_features=32, out_features=8, k=3,
             use_bf16=False, atol=1e-5, key=k1)
    # Larger head: exercises class padding and the bf16-operand /
    # f32-accumulate MXU path (single class tile, single batch tile).
    run_case(batch=20, in_features=64, out_features=600, k=3,
             use_bf16=True, atol=2e-2, key=k2)
    # Multi-tile grid (several class tiles x several batch tiles), f32 path.
    run_case(batch=40, in_features=96, out_features=600, k=3,
             use_bf16=False, atol=1e-5, key=k3)

    print("KERNEL_OK")
</pallas_src>

<mosaic_0001>
module attributes {stable_mosaic.version = 11 : i64} {
  func.func @_arc_subcenter_kernel(%arg0: i32, %arg1: i32, %arg2: memref<8x128xf32, #tpu.memory_space<vmem>>, %arg3: memref<128x384xf32, #tpu.memory_space<vmem>>, %arg4: memref<8x128xf32, #tpu.memory_space<vmem>>) attributes {dimension_semantics = [#tpu.dimension_semantics<parallel>, #tpu.dimension_semantics<parallel>], iteration_bounds = array<i64: 1, 1>, scalar_prefetch = 0 : i64, scratch_operands = 0 : i64, tpu.core_type = #tpu.core_type<tc>, window_params = [{transform_indices = @transform_0, window_bounds = array<i64: 8, 128>}, {transform_indices = @transform_1, window_bounds = array<i64: 128, 384>}, {transform_indices = @transform_2, window_bounds = array<i64: 8, 128>}]} {
    %c0 = arith.constant 0 : index
    %c0_0 = arith.constant 0 : index
    %0 = vector.load %arg2[%c0, %c0_0] : memref<8x128xf32, #tpu.memory_space<vmem>>, vector<8x128xf32>
    %c0_1 = arith.constant 0 : index
    %c0_2 = arith.constant 0 : index
    %1 = vector.load %arg3[%c0_1, %c0_2] : memref<128x384xf32, #tpu.memory_space<vmem>>, vector<128x384xf32>
    %cst = arith.constant dense<0.000000e+00> : vector<8x384xf32>
    %2 = tpu.matmul %0, %1, %cst {dimension_numbers = #tpu.dot_dimension_numbers<[1], [0], [0], [1], [0, 0, 1, 1], [], []>} : vector<8x128xf32>, vector<128x384xf32>, vector<8x384xf32> -> vector<8x384xf32>
    %3 = vector.extract_strided_slice %2 {offsets = [0, 0], sizes = [8, 128], strides = [1, 1]} : vector<8x384xf32> to vector<8x128xf32>
    %4 = vector.extract_strided_slice %2 {offsets = [0, 128], sizes = [8, 128], strides = [1, 1]} : vector<8x384xf32> to vector<8x128xf32>
    %5 = arith.maximumf %3, %4 : vector<8x128xf32>
    %6 = vector.extract_strided_slice %2 {offsets = [0, 256], sizes = [8, 128], strides = [1, 1]} : vector<8x384xf32> to vector<8x128xf32>
    %7 = arith.maximumf %5, %6 : vector<8x128xf32>
    %c0_3 = arith.constant 0 : index
    %c0_4 = arith.constant 0 : index
    %8 = vector.load %arg4[%c0_3, %c0_4] : memref<8x128xf32, #tpu.memory_space<vmem>>, vector<8x128xf32>
    tpu.vector_store %arg4[%c0_3, %c0_4], %7 {strides = array<i32>} : memref<8x128xf32, #tpu.memory_space<vmem>>, vector<8x128xf32>,
    return
  }
  func.func @transform_0(%arg0: i32, %arg1: i32) -> (i32, i32) {
    %c0_i32 = arith.constant 0 : i32
    %c0_i32_0 = arith.constant 0 : i32
    return %arg1, %c0_i32 : i32, i32
  }
  func.func @transform_1(%arg0: i32, %arg1: i32) -> (i32, i32) {
    %c0_i32 = arith.constant 0 : i32
    %c0_i32_0 = arith.constant 0 : i32
    return %c0_i32, %arg0 : i32, i32
  }
  func.func @transform_2(%arg0: i32, %arg1: i32) -> (i32, i32) {
    %c0_i32 = arith.constant 0 : i32
    return %arg1, %arg0 : i32, i32
  }
}

</mosaic_0001>

<llo_original>
// kernel: tpu_custom_call.1
$region0: #{tpu_custom_call.1}
  #allocation0 [shape = 'u32[]', space=smem, size = 0x4, offset = 0x4, fixed_abs, tag = 'smem constant byte address 0x4 - core index']
  #allocation1 [shape = 'u32[144,128]{1,0:T(1,128)}', space=vmem, size = 0x12000, scoped, tag = 'internal scratch']
  %s0 = inlined_call_operand.hbm [shape: f32[8,128], index: 0, kind: input, shape index: {}]
  %s1 = inlined_call_operand.hbm [shape: f32[128,384], index: 1, kind: input, shape index: {}]
  %s2 = inlined_call_operand.hbm [shape: f32[8,128], index: 2, kind: output, shape index: {}]
  %s3 = sld [smem:[#allocation0]]
  $region26: #{tpu_custom_call.1} parent=0
    _
  %s5 = ssub.s32 1, %s3
  %s6 = scalar_select 0, %s5, %s3
  $region1: #{tpu_custom_call.1} parent=0
    #allocation2 [shape = 'u8[4096]{0}', space=vmem, size = 0x1000, scoped, tag = 'input window, operand 0, single buffered']
    #allocation3 [shape = 's32[1]{0}', space=sflag, size = 0x4, scoped, tag = 'scoped memory for tpu_custom_call.1']
    #allocation4 [shape = 's32[1]{0}', space=sflag, size = 0x4, scoped, tag = 'scoped memory for tpu_custom_call.1']
    #allocation5 [shape = 'u8[196608]{0}', space=vmem, size = 0x30000, scoped, tag = 'input window, operand 1, single buffered']
    #allocation6 [shape = 's32[1]{0}', space=sflag, size = 0x4, scoped, tag = 'scoped memory for tpu_custom_call.1']
    #allocation7 [shape = 'u8[4096]{0}', space=vmem, size = 0x1000, scoped, tag = 'output window, operand 0, single buffered']
    %7 = vsyncpa [#allocation3], 0
    %8 = vsyncpa [#allocation6], 0
    %9 = vsyncpa [#allocation4], 0
    // Predicated region
    $region2: #{tpu_custom_call.1} parent=1 // pred_check
      _
    $region3: #{tpu_custom_call.1} parent=1 // pred_check_branch
      %11 = sbr.rel (0) target = $region5
    $region4: #{tpu_custom_call.1} parent=1 // pred_region
      %s13 = ssub.s32 128, 128
      %14 = vsyncadd [#allocation3], %s13
      %s16 = sshll.u32 [#allocation2], 4
      %s17 = int_to_ptr.vmem [resolvable:$true] %s16
      %19 = dma.hbm_to_vmem [thread:$0]  %s0, 128, %s17, [#allocation3]
    $region5: #{tpu_custom_call.1} parent=1 // pred_fallthru
      _
    // Predicated region
    $region6: #{tpu_custom_call.1} parent=1 // pred_check
      _
    $region7: #{tpu_custom_call.1} parent=1 // pred_check_branch
      %21 = sbr.rel (0) target = $region9
    $region8: #{tpu_custom_call.1} parent=1 // pred_region
      %s23 = ssub.s32 6144, 6144
      %24 = vsyncadd [#allocation6], %s23
      %s25 = sshll.u32 [#allocation5], 4
      %s26 = int_to_ptr.vmem [resolvable:$true] %s25
      %31 = dma.hbm_to_vmem [thread:$0]  %s1, 6144, %s26, [#allocation6], 384, 384, 24
    $region9: #{tpu_custom_call.1} parent=1 // pred_fallthru
      _
    // Predicated region
    $region10: #{tpu_custom_call.1} parent=1 // pred_check
      _
    $region11: #{tpu_custom_call.1} parent=1 // pred_check_branch
      %33 = sbr.rel (0) target = $region13
    $region12: #{tpu_custom_call.1} parent=1 // pred_region
      %34 = dma.done [#allocation3], 128
    $region13: #{tpu_custom_call.1} parent=1 // pred_fallthru
      _
    // Predicated region
    $region14: #{tpu_custom_call.1} parent=1 // pred_check
      _
    $region15: #{tpu_custom_call.1} parent=1 // pred_check_branch
      %36 = sbr.rel (0) target = $region17
    $region16: #{tpu_custom_call.1} parent=1 // pred_region
      %37 = dma.done [#allocation6], 6144
    $region17: #{tpu_custom_call.1} parent=1 // pred_fallthru
      _
    %v38 = vld [vmem:[#allocation2] sm:$0xff]
    %v39 = vld [vmem:[#allocation5] sm:$0xff]
    %v40 = vld [vmem:[#allocation5 + $0x8] sm:$0xff]
    %v41 = vld [vmem:[#allocation5 + $0x10] sm:$0xff]
    %v42 = vld [vmem:[#allocation5 + $0x18] sm:$0xff]
    %v43 = vld [vmem:[#allocation5 + $0x20] sm:$0xff]
    %v44 = vld [vmem:[#allocation5 + $0x28] sm:$0xff]
    %v45 = vld [vmem:[#allocation5 + $0x30] sm:$0xff]
    %v46 = vld [vmem:[#allocation5 + $0x38] sm:$0xff]
    %v47 = vld [vmem:[#allocation5 + $0x40] sm:$0xff]
    %v48 = vld [vmem:[#allocation5 + $0x48] sm:$0xff]
    %v49 = vld [vmem:[#allocation5 + $0x50] sm:$0xff]
    %v50 = vld [vmem:[#allocation5 + $0x58] sm:$0xff]
    %v51 = vld [vmem:[#allocation5 + $0x60] sm:$0xff]
    %v52 = vld [vmem:[#allocation5 + $0x68] sm:$0xff]
    %v53 = vld [vmem:[#allocation5 + $0x70] sm:$0xff]
    %v54 = vld [vmem:[#allocation5 + $0x78] sm:$0xff]
    %v55 = vld [vmem:[#allocation5 + $0x80] sm:$0xff]
    %v56 = vld [vmem:[#allocation5 + $0x88] sm:$0xff]
    %v57 = vld [vmem:[#allocation5 + $0x90] sm:$0xff]
    %v58 = vld [vmem:[#allocation5 + $0x98] sm:$0xff]
    %v59 = vld [vmem:[#allocation5 + $0xa0] sm:$0xff]
    %v60 = vld [vmem:[#allocation5 + $0xa8] sm:$0xff]
    %v61 = vld [vmem:[#allocation5 + $0xb0] sm:$0xff]
    %v62 = vld [vmem:[#allocation5 + $0xb8] sm:$0xff]
    %v63 = vld [vmem:[#allocation5 + $0xc0] sm:$0xff]
    %v64 = vld [vmem:[#allocation5 + $0xc8] sm:$0xff]
    %v65 = vld [vmem:[#allocation5 + $0xd0] sm:$0xff]
    %v66 = vld [vmem:[#allocation5 + $0xd8] sm:$0xff]
    %v67 = vld [vmem:[#allocation5 + $0xe0] sm:$0xff]
    %v68 = vld [vmem:[#allocation5 + $0xe8] sm:$0xff]
    %v69 = vld [vmem:[#allocation5 + $0xf0] sm:$0xff]
    %v70 = vld [vmem:[#allocation5 + $0xf8] sm:$0xff]
    %v71 = vld [vmem:[#allocation5 + $0x100] sm:$0xff]
    %v72 = vld [vmem:[#allocation5 + $0x108] sm:$0xff]
    %v73 = vld [vmem:[#allocation5 + $0x110] sm:$0xff]
    %v74 = vld [vmem:[#allocation5 + $0x118] sm:$0xff]
    %v75 = vld [vmem:[#allocation5 + $0x120] sm:$0xff]
    %v76 = vld [vmem:[#allocation5 + $0x128] sm:$0xff]
    %v77 = vld [vmem:[#allocation5 + $0x130] sm:$0xff]
    %v78 = vld [vmem:[#allocation5 + $0x138] sm:$0xff]
    %v79 = vld [vmem:[#allocation5 + $0x140] sm:$0xff]
    %v80 = vld [vmem:[#allocation5 + $0x148] sm:$0xff]
    %v81 = vld [vmem:[#allocation5 + $0x150] sm:$0xff]
    %v82 = vld [vmem:[#allocation5 + $0x158] sm:$0xff]
    %v83 = vld [vmem:[#allocation5 + $0x160] sm:$0xff]
    %v84 = vld [vmem:[#allocation5 + $0x168] sm:$0xff]
    %v85 = vld [vmem:[#allocation5 + $0x170] sm:$0xff]
    %v86 = vld [vmem:[#allocation5 + $0x178] sm:$0xff]
    %87 = vmatprep.subr.mxu0 %v40
    %88 = vmatpush1.msra.mxu0 %v39
    %89 = vmatprep.subr.mxu0 %v43
    %90 = vmatpush1.msra.mxu0 %v42
    %91 = vmatprep.subr.mxu0 %v46
    %92 = vmatpush1.msra.mxu0 %v45
    %93 = vmatprep.subr.mxu0 %v49
    %94 = vmatpush1.msra.mxu0 %v48
    %95 = vmatprep.subr.mxu0 %v52
    %96 = vmatpush1.msra.mxu0 %v51
    %97 = vmatprep.subr.mxu0 %v55
    %98 = vmatpush1.msra.mxu0 %v54
    %99 = vmatprep.subr.mxu0 %v58
    %100 = vmatpush1.msra.mxu0 %v57
    %101 = vmatprep.subr.mxu0 %v61
    %102 = vmatpush1.msra.mxu0 %v60
    %103 = vmatprep.subr.mxu0 %v64
    %104 = vmatpush1.msra.mxu0 %v63
    %105 = vmatprep.subr.mxu0 %v67
    %106 = vmatpush1.msra.mxu0 %v66
    %107 = vmatprep.subr.mxu0 %v70
    %108 = vmatpush1.msra.mxu0 %v69
    %109 = vmatprep.subr.mxu0 %v73
    %110 = vmatpush1.msra.mxu0 %v72
    %111 = vmatprep.subr.mxu0 %v76
    %112 = vmatpush1.msra.mxu0 %v75
    %113 = vmatprep.subr.mxu0 %v79
    %114 = vmatpush1.msra.mxu0 %v78
    %115 = vmatprep.subr.mxu0 %v82
    %116 = vmatpush1.msra.mxu0 %v81
    %117 = vmatprep.subr.mxu0 %v85
    %118 = vmatpush1.msra.mxu0 %v84
    %119 = vmatprep.subr.mxu0 0.0
    %120 = vmatpush1.msra.mxu0 0.0
    %121 = vmatprep.subr.mxu0 0.0
    %122 = vmatpush1.msra.mxu0 0.0
    %123 = vmatprep.subr.mxu0 0.0
    %124 = vmatpush1.msra.mxu0 0.0
    %125 = vmatprep.subr.mxu0 0.0
    %126 = vmatpush1.msra.mxu0 0.0
    %127 = vmatprep.subr.mxu0 0.0
    %128 = vmatpush1.msra.mxu0 0.0
    %129 = vmatprep.subr.mxu0 0.0
    %130 = vmatpush1.msra.mxu0 0.0
    %131 = vmatprep.subr.mxu0 0.0
    %132 = vmatpush1.msra.mxu0 0.0
    %133 = vmatprep.subr.mxu0 0.0
    %134 = vmatpush1.msra.mxu0 0.0
    %135 = vmatprep.subr.mxu0 0.0
    %136 = vmatpush1.msra.mxu0 0.0
    %137 = vmatprep.subr.mxu0 0.0
    %138 = vmatpush1.msra.mxu0 0.0
    %139 = vmatprep.subr.mxu0 0.0
    %140 = vmatpush1.msra.mxu0 0.0
    %141 = vmatprep.subr.mxu0 0.0
    %142 = vmatpush1.msra.mxu0 0.0
    %143 = vmatprep.subr.mxu0 0.0
    %144 = vmatpush1.msra.mxu0 0.0
    %145 = vmatprep.subr.mxu0 0.0
    %146 = vmatpush1.msra.mxu0 0.0
    %147 = vmatprep.subr.mxu0 0.0
    %148 = vmatpush1.msra.mxu0 0.0
    %149 = vmatprep.subr.mxu0 0.0
    %150 = vmatpush1.msra.mxu0 0.0
    %151 = vmatprep.mubr.f32.mxu0 0.0
    %152 = vmatmul.mubr.f32.gmra.mrb[0].mxu0 %v38
    %v153 = vpop.f32.mrb[0].mxu0
    %v154 = vadd.f32 0.0, %v153
    %v155 = vpop.f32.mrb[0].mxu0
    %v156 = vadd.f32 0.0, %v155
    %157 = vdwg.mxu0
    %158 = vmatprep.subr.mxu0 0.0
    %159 = vmatpush1.msra.mxu0 %v41
    %160 = vmatprep.subr.mxu0 0.0
    %161 = vmatpush1.msra.mxu0 %v44
    %162 = vmatprep.subr.mxu0 0.0
    %163 = vmatpush1.msra.mxu0 %v47
    %164 = vmatprep.subr.mxu0 0.0
    %165 = vmatpush1.msra.mxu0 %v50
    %166 = vmatprep.subr.mxu0 0.0
    %167 = vmatpush1.msra.mxu0 %v53
    %168 = vmatprep.subr.mxu0 0.0
    %169 = vmatpush1.msra.mxu0 %v56
    %170 = vmatprep.subr.mxu0 0.0
    %171 = vmatpush1.msra.mxu0 %v59
    %172 = vmatprep.subr.mxu0 0.0
    %173 = vmatpush1.msra.mxu0 %v62
    %174 = vmatprep.subr.mxu0 0.0
    %175 = vmatpush1.msra.mxu0 %v65
    %176 = vmatprep.subr.mxu0 0.0
    %177 = vmatpush1.msra.mxu0 %v68
    %178 = vmatprep.subr.mxu0 0.0
    %179 = vmatpush1.msra.mxu0 %v71
    %180 = vmatprep.subr.mxu0 0.0
    %181 = vmatpush1.msra.mxu0 %v74
    %182 = vmatprep.subr.mxu0 0.0
    %183 = vmatpush1.msra.mxu0 %v77
    %184 = vmatprep.subr.mxu0 0.0
    %185 = vmatpush1.msra.mxu0 %v80
    %186 = vmatprep.subr.mxu0 0.0
    %187 = vmatpush1.msra.mxu0 %v83
    %188 = vmatprep.subr.mxu0 0.0
    %189 = vmatpush1.msra.mxu0 %v86
    %190 = vmatprep.subr.mxu0 0.0
    %191 = vmatpush1.msra.mxu0 0.0
    %192 = vmatprep.subr.mxu0 0.0
    %193 = vmatpush1.msra.mxu0 0.0
    %194 = vmatprep.subr.mxu0 0.0
    %195 = vmatpush1.msra.mxu0 0.0
    %196 = vmatprep.subr.mxu0 0.0
    %197 = vmatpush1.msra.mxu0 0.0
    %198 = vmatprep.subr.mxu0 0.0
    %199 = vmatpush1.msra.mxu0 0.0
    %200 = vmatprep.subr.mxu0 0.0
    %201 = vmatpush1.msra.mxu0 0.0
    %202 = vmatprep.subr.mxu0 0.0
    %203 = vmatpush1.msra.mxu0 0.0
    %204 = vmatprep.subr.mxu0 0.0
    %205 = vmatpush1.msra.mxu0 0.0
    %206 = vmatprep.subr.mxu0 0.0
    %207 = vmatpush1.msra.mxu0 0.0
    %208 = vmatprep.subr.mxu0 0.0
    %209 = vmatpush1.msra.mxu0 0.0
    %210 = vmatprep.subr.mxu0 0.0
    %211 = vmatpush1.msra.mxu0 0.0
    %212 = vmatprep.subr.mxu0 0.0
    %213 = vmatpush1.msra.mxu0 0.0
    %214 = vmatprep.subr.mxu0 0.0
    %215 = vmatpush1.msra.mxu0 0.0
    %216 = vmatprep.subr.mxu0 0.0
    %217 = vmatpush1.msra.mxu0 0.0
    %218 = vmatprep.subr.mxu0 0.0
    %219 = vmatpush1.msra.mxu0 0.0
    %220 = vmatprep.subr.mxu0 0.0
    %221 = vmatpush1.msra.mxu0 0.0
    %222 = vmatprep.mubr.f32.mxu0 0.0
    %223 = vmatmul.mubr.f32.gmra.mrb[0].mxu0 %v38
    %v224 = vpop.f32.mrb[0].mxu0
    %v225 = vadd.f32 0.0, %v224
    %v226 = vpop.f32.mrb[0].mxu0
    %227 = vdwg.mxu0
    %v228 = vmax.f32 %v154, %v156
    %v229 = vmax.f32 %v228, %v225
    %230 = vst [vmem:[#allocation7] sm:$0xff] %v229
    // Predicated region
    $region18: #{tpu_custom_call.1} parent=1 // pred_check
      _
    $region19: #{tpu_custom_call.1} parent=1 // pred_check_branch
      %232 = sbr.rel (0) target = $region21
    $region20: #{tpu_custom_call.1} parent=1 // pred_region
      %s234 = ssub.s32 128, 128
      %235 = vsyncadd [#allocation4], %s234
      %s237 = sshll.u32 [#allocation7], 4
      %s238 = int_to_ptr.vmem [resolvable:$true] %s237
      %240 = dma.vmem_to_hbm [thread:$0]  %s238, 128, %s2, [#allocation4]
    $region21: #{tpu_custom_call.1} parent=1 // pred_fallthru
      _
    // Predicated region
    $region22: #{tpu_custom_call.1} parent=1 // pred_check
      _
    $region23: #{tpu_custom_call.1} parent=1 // pred_check_branch
      %242 = sbr.rel (0) target = $region25
    $region24: #{tpu_custom_call.1} parent=1 // pred_region
      %243 = dma.done [#allocation4], 128
    $region25: #{tpu_custom_call.1} parent=1 // pred_fallthru
      _
    %244 = vsyncpa [#allocation3], 1
    %245 = vsyncpa [#allocation6], 1
    %246 = vsyncpa [#allocation4], 1

</llo_original>
